<compile_context>
chip_gen: v7x
topology: tpu7x:2x2x1
jax: 0.10.0
libtpu: 0.0.40
codegen_flags: <defaults>
</compile_context>

<pallas_src>
import jax
import jax.numpy as jnp
from jax import lax
from jax.experimental import pallas as pl
from jax.experimental.pallas import tpu as pltpu


def _round_up(x, m):
    return ((x + m - 1) // m) * m


def _qp_cosine_kernel(x1_ref, x2_ref, emb_ref, w_ref, b_ref, o_ref):
    # x1_ref, x2_ref: [TB, L] int32 token ids (VMEM, streamed per grid step)
    # emb_ref:        [V, E]  embedding table (VMEM-resident; any float dtype)
    # w_ref, b_ref:   [2] f32 in SMEM (fc weight flattened from [2,1]; bias)
    # o_ref:          [TB, 2] f32 logits
    tb, seq_len = x1_ref.shape
    vocab, _ = emb_ref.shape

    table = emb_ref[...].astype(jnp.float32)            # [V, E] (tiny, read once)
    inv_l = jnp.float32(1.0 / seq_len)
    lane_iota = lax.broadcasted_iota(jnp.int32, (tb, vocab), 1)

    def mean_embed(ids_ref):
        # Mean-weight matrix: w[b, v] = count(v in ids[b, :]) / L.
        ids = ids_ref[...]                               # [TB, L] int32
        w = jnp.zeros((tb, vocab), jnp.float32)
        for l in range(seq_len):                         # static, small L
            col = ids[:, l:l + 1]                        # [TB, 1]
            w = w + jnp.where(col == lane_iota, inv_l, jnp.float32(0.0))
        # Fused gather + mean as one MXU contraction: [TB, V] @ [V, E] -> [TB, E]
        return jnp.dot(w, table, preferred_element_type=jnp.float32)

    q1m = mean_embed(x1_ref)                             # [TB, E]
    q2m = mean_embed(x2_ref)                             # [TB, E]

    dot = jnp.sum(q1m * q2m, axis=-1, keepdims=True)     # [TB, 1]
    n1sq = jnp.sum(q1m * q1m, axis=-1, keepdims=True)    # [TB, 1]
    n2sq = jnp.sum(q2m * q2m, axis=-1, keepdims=True)    # [TB, 1]

    # torch CosineSimilarity clamps each norm to eps:
    #   cos = dot / (max(||q1||, eps) * max(||q2||, eps))
    # sqrt(max(n^2, eps^2)) == max(n, eps), so one rsqrt (EUP slot) replaces
    # the two sqrts and the divide.
    eps2 = jnp.float32(1e-8 * 1e-8)
    cos = dot * lax.rsqrt(jnp.maximum(n1sq, eps2) * jnp.maximum(n2sq, eps2))

    # fc: Linear(1, 2) -> out[b, j] = cos[b] * w[j] + b[j], w/b read from SMEM.
    lane = lax.broadcasted_iota(jnp.int32, (1, 2), 1)
    w_row = jnp.where(lane == 0, w_ref[0], w_ref[1])      # [1, 2]
    b_row = jnp.where(lane == 0, b_ref[0], b_ref[1])      # [1, 2]
    o_ref[...] = (cos * w_row + b_row).astype(o_ref.dtype)


def question_pair_cosine_similarity(x1, x2, embedding_matrix, fc_w, fc_b,
                                     *, block_b=None):
    """x1, x2: [B, L] int token ids.  embedding_matrix: [V, E] float (f32/bf16).
    fc_w: [2, 1], fc_b: [2].  Returns [B, 2] float32 logits."""
    x1 = jnp.asarray(x1, jnp.int32)
    x2 = jnp.asarray(x2, jnp.int32)
    B, L = x1.shape
    V, E = embedding_matrix.shape
    table_bytes = V * E * jnp.asarray(embedding_matrix).dtype.itemsize

    if block_b is None:
        # Target >=4 grid steps when B allows (v7x megacore sharding + real
        # DMA/compute overlap), capped so in-kernel f32 temporaries
        # (weights [TB, V] x2, means [TB, E] x2) stay within a few MiB.
        target = _round_up(max(1, -(-B // 4)), 8)
        temp_bytes_per_row = 4 * (2 * V + 2 * E + 8)
        cap = max(8, ((4 * 1024 * 1024) // temp_bytes_per_row) // 8 * 8)
        block_b = min(max(8, target), cap, 1024)
    block_b = max(8, _round_up(int(block_b), 8))

    # Pad the batch so it divides evenly into TB tiles (padded rows reuse token
    # id 0 -> finite cos; sliced off below).
    B_pad = _round_up(B, block_b)
    if B_pad != B:
        pad = B_pad - B
        x1 = jnp.pad(x1, ((0, pad), (0, 0)))
        x2 = jnp.pad(x2, ((0, pad), (0, 0)))

    w = jnp.asarray(fc_w, jnp.float32).reshape(2)          # [2]  (w0, w1)
    b = jnp.asarray(fc_b, jnp.float32).reshape(2)          # [2]

    # VMEM budget from actual usage: resident table (2 bufs worst case),
    # double-buffered id windows, in-kernel f32 temporaries, plus headroom.
    ids_block_bytes = block_b * L * 4
    vmem_limit = (2 * table_bytes
                  + 2 * 2 * ids_block_bytes
                  + 4 * block_b * (2 * V + 2 * E + 8)
                  + (4 << 20))
    vmem_limit = int(min(max(vmem_limit, 8 << 20), 32 << 20))

    grid = (B_pad // block_b,)
    out = pl.pallas_call(
        _qp_cosine_kernel,
        out_shape=jax.ShapeDtypeStruct((B_pad, 2), jnp.float32),
        grid_spec=pltpu.PrefetchScalarGridSpec(
            num_scalar_prefetch=0,
            grid=grid,
            in_specs=[
                pl.BlockSpec((block_b, L), lambda i: (i, 0)),
                pl.BlockSpec((block_b, L), lambda i: (i, 0)),
                pl.BlockSpec((V, E), lambda i: (0, 0)),   # VMEM-resident table
                pl.BlockSpec(memory_space=pltpu.SMEM),
                pl.BlockSpec(memory_space=pltpu.SMEM),
            ],
            out_specs=pl.BlockSpec((block_b, 2), lambda i: (i, 0)),
        ),
        compiler_params=pltpu.CompilerParams(
            dimension_semantics=("parallel",),
            vmem_limit_bytes=vmem_limit,
        ),
    )(x1, x2, embedding_matrix, w, b)
    return out[:B]


if __name__ == "__main__":
    key = jax.random.PRNGKey(0)
    k_emb, k_x1, k_x2, k_w, k_b = jax.random.split(key, 5)

    # Small deterministic setup consistent with the module's forward.
    vocab_size = 64
    embedding_size = 128   # lane-dense last dim (multiple of 128)
    batch = 12             # not a multiple of the batch tile -> exercises padding
    seq = 8

    embedding_matrix = jax.random.normal(
        k_emb, (vocab_size, embedding_size), dtype=jnp.float32)
    x1 = jax.random.randint(k_x1, (batch, seq), 0, vocab_size, dtype=jnp.int32)
    x2 = jax.random.randint(k_x2, (batch, seq), 0, vocab_size, dtype=jnp.int32)

    # nn.Linear(1, 2): weight [2, 1], bias [2]
    fc_w = jax.random.normal(k_w, (2, 1), dtype=jnp.float32) * 0.5
    fc_b = jax.random.normal(k_b, (2,), dtype=jnp.float32) * 0.1

    # Pure-JAX reference (same math as the PyTorch forward, per-norm eps clamp).
    q1 = jnp.take(embedding_matrix, x1, axis=0).mean(axis=1)
    q2 = jnp.take(embedding_matrix, x2, axis=0).mean(axis=1)
    n1 = jnp.linalg.norm(q1, axis=-1)
    n2 = jnp.linalg.norm(q2, axis=-1)
    cos = jnp.sum(q1 * q2, axis=-1) / (jnp.maximum(n1, 1e-8) * jnp.maximum(n2, 1e-8))
    ref = cos[:, None] * fc_w.reshape(1, 2) + fc_b.reshape(1, 2)

    # 1) Explicit small tile -> multi-step pipelined grid + batch padding path.
    out_tiled = question_pair_cosine_similarity(
        x1, x2, embedding_matrix, fc_w, fc_b, block_b=8)
    out_tiled = jax.block_until_ready(out_tiled)
    assert out_tiled.shape == (batch, 2)
    assert jnp.allclose(out_tiled, ref, atol=1e-5, rtol=1e-5), (out_tiled, ref)

    # 2) Default (auto-derived) tile size.
    out_auto = question_pair_cosine_similarity(
        x1, x2, embedding_matrix, fc_w, fc_b)
    out_auto = jax.block_until_ready(out_auto)
    assert jnp.allclose(out_auto, ref, atol=1e-5, rtol=1e-5), (out_auto, ref)

    print("KERNEL_OK")
</pallas_src>

<mosaic_0001>
module attributes {stable_mosaic.version = 11 : i64} {
  func.func @_qp_cosine_kernel(%arg0: i32, %arg1: memref<8x8xi32, #tpu.memory_space<vmem>>, %arg2: memref<8x8xi32, #tpu.memory_space<vmem>>, %arg3: memref<64x128xf32, #tpu.memory_space<vmem>>, %arg4: memref<2xf32, #tpu.memory_space<smem>>, %arg5: memref<2xf32, #tpu.memory_space<smem>>, %arg6: memref<8x2xf32, #tpu.memory_space<vmem>>) attributes {dimension_semantics = [#tpu.dimension_semantics<parallel>], iteration_bounds = array<i64: 2>, scalar_prefetch = 0 : i64, scratch_operands = 0 : i64, tpu.core_type = #tpu.core_type<tc>, window_params = [{transform_indices = @transform_0, window_bounds = array<i64: 8, 8>}, {transform_indices = @transform_1, window_bounds = array<i64: 8, 8>}, {pipeline_mode = #tpu.pipeline_mode<synchronous>, transform_indices = @transform_2, window_bounds = array<i64: 64, 128>}, {transform_indices = @transform_3, window_bounds = array<i64: 2>}, {transform_indices = @transform_4, window_bounds = array<i64: 2>}, {transform_indices = @transform_5, window_bounds = array<i64: 8, 2>}]} {
    %c0 = arith.constant 0 : index
    %c0_0 = arith.constant 0 : index
    %0 = vector.load %arg3[%c0, %c0_0] : memref<64x128xf32, #tpu.memory_space<vmem>>, vector<64x128xf32>
    %1 = tpu.iota {dimensions = array<i32: 1>} : vector<8x64xi32>
    %c0_1 = arith.constant 0 : index
    %c0_2 = arith.constant 0 : index
    %2 = vector.load %arg1[%c0_1, %c0_2] : memref<8x8xi32, #tpu.memory_space<vmem>>, vector<8x8xi32>
    %cst = arith.constant 0.000000e+00 : f32
    %3 = vector.broadcast %cst : f32 to vector<8x64xf32>
    %4 = vector.extract_strided_slice %2 {offsets = [0, 0], sizes = [8, 1], strides = [1, 1]} : vector<8x8xi32> to vector<8x1xi32>
    %5 = vector.broadcast %4 : vector<8x1xi32> to vector<8x64xi32>
    %6 = arith.cmpi eq, %5, %1 : vector<8x64xi32>
    %cst_3 = arith.constant 1.250000e-01 : f32
    %cst_4 = arith.constant 0.000000e+00 : f32
    %7 = vector.broadcast %cst_3 : f32 to vector<8x64xf32>
    %8 = vector.broadcast %cst_4 : f32 to vector<8x64xf32>
    %9 = arith.select %6, %7, %8 : vector<8x64xi1>, vector<8x64xf32>
    %10 = arith.addf %3, %9 : vector<8x64xf32>
    %11 = vector.extract_strided_slice %2 {offsets = [0, 1], sizes = [8, 1], strides = [1, 1]} : vector<8x8xi32> to vector<8x1xi32>
    %12 = vector.broadcast %11 : vector<8x1xi32> to vector<8x64xi32>
    %13 = arith.cmpi eq, %12, %1 : vector<8x64xi32>
    %cst_5 = arith.constant 1.250000e-01 : f32
    %cst_6 = arith.constant 0.000000e+00 : f32
    %14 = vector.broadcast %cst_5 : f32 to vector<8x64xf32>
    %15 = vector.broadcast %cst_6 : f32 to vector<8x64xf32>
    %16 = arith.select %13, %14, %15 : vector<8x64xi1>, vector<8x64xf32>
    %17 = arith.addf %10, %16 : vector<8x64xf32>
    %18 = vector.extract_strided_slice %2 {offsets = [0, 2], sizes = [8, 1], strides = [1, 1]} : vector<8x8xi32> to vector<8x1xi32>
    %19 = vector.broadcast %18 : vector<8x1xi32> to vector<8x64xi32>
    %20 = arith.cmpi eq, %19, %1 : vector<8x64xi32>
    %cst_7 = arith.constant 1.250000e-01 : f32
    %cst_8 = arith.constant 0.000000e+00 : f32
    %21 = vector.broadcast %cst_7 : f32 to vector<8x64xf32>
    %22 = vector.broadcast %cst_8 : f32 to vector<8x64xf32>
    %23 = arith.select %20, %21, %22 : vector<8x64xi1>, vector<8x64xf32>
    %24 = arith.addf %17, %23 : vector<8x64xf32>
    %25 = vector.extract_strided_slice %2 {offsets = [0, 3], sizes = [8, 1], strides = [1, 1]} : vector<8x8xi32> to vector<8x1xi32>
    %26 = vector.broadcast %25 : vector<8x1xi32> to vector<8x64xi32>
    %27 = arith.cmpi eq, %26, %1 : vector<8x64xi32>
    %cst_9 = arith.constant 1.250000e-01 : f32
    %cst_10 = arith.constant 0.000000e+00 : f32
    %28 = vector.broadcast %cst_9 : f32 to vector<8x64xf32>
    %29 = vector.broadcast %cst_10 : f32 to vector<8x64xf32>
    %30 = arith.select %27, %28, %29 : vector<8x64xi1>, vector<8x64xf32>
    %31 = arith.addf %24, %30 : vector<8x64xf32>
    %32 = vector.extract_strided_slice %2 {offsets = [0, 4], sizes = [8, 1], strides = [1, 1]} : vector<8x8xi32> to vector<8x1xi32>
    %33 = vector.broadcast %32 : vector<8x1xi32> to vector<8x64xi32>
    %34 = arith.cmpi eq, %33, %1 : vector<8x64xi32>
    %cst_11 = arith.constant 1.250000e-01 : f32
    %cst_12 = arith.constant 0.000000e+00 : f32
    %35 = vector.broadcast %cst_11 : f32 to vector<8x64xf32>
    %36 = vector.broadcast %cst_12 : f32 to vector<8x64xf32>
    %37 = arith.select %34, %35, %36 : vector<8x64xi1>, vector<8x64xf32>
    %38 = arith.addf %31, %37 : vector<8x64xf32>
    %39 = vector.extract_strided_slice %2 {offsets = [0, 5], sizes = [8, 1], strides = [1, 1]} : vector<8x8xi32> to vector<8x1xi32>
    %40 = vector.broadcast %39 : vector<8x1xi32> to vector<8x64xi32>
    %41 = arith.cmpi eq, %40, %1 : vector<8x64xi32>
    %cst_13 = arith.constant 1.250000e-01 : f32
    %cst_14 = arith.constant 0.000000e+00 : f32
    %42 = vector.broadcast %cst_13 : f32 to vector<8x64xf32>
    %43 = vector.broadcast %cst_14 : f32 to vector<8x64xf32>
    %44 = arith.select %41, %42, %43 : vector<8x64xi1>, vector<8x64xf32>
    %45 = arith.addf %38, %44 : vector<8x64xf32>
    %46 = vector.extract_strided_slice %2 {offsets = [0, 6], sizes = [8, 1], strides = [1, 1]} : vector<8x8xi32> to vector<8x1xi32>
    %47 = vector.broadcast %46 : vector<8x1xi32> to vector<8x64xi32>
    %48 = arith.cmpi eq, %47, %1 : vector<8x64xi32>
    %cst_15 = arith.constant 1.250000e-01 : f32
    %cst_16 = arith.constant 0.000000e+00 : f32
    %49 = vector.broadcast %cst_15 : f32 to vector<8x64xf32>
    %50 = vector.broadcast %cst_16 : f32 to vector<8x64xf32>
    %51 = arith.select %48, %49, %50 : vector<8x64xi1>, vector<8x64xf32>
    %52 = arith.addf %45, %51 : vector<8x64xf32>
    %53 = vector.extract_strided_slice %2 {offsets = [0, 7], sizes = [8, 1], strides = [1, 1]} : vector<8x8xi32> to vector<8x1xi32>
    %54 = vector.broadcast %53 : vector<8x1xi32> to vector<8x64xi32>
    %55 = arith.cmpi eq, %54, %1 : vector<8x64xi32>
    %cst_17 = arith.constant 1.250000e-01 : f32
    %cst_18 = arith.constant 0.000000e+00 : f32
    %56 = vector.broadcast %cst_17 : f32 to vector<8x64xf32>
    %57 = vector.broadcast %cst_18 : f32 to vector<8x64xf32>
    %58 = arith.select %55, %56, %57 : vector<8x64xi1>, vector<8x64xf32>
    %59 = arith.addf %52, %58 : vector<8x64xf32>
    %cst_19 = arith.constant dense<0.000000e+00> : vector<8x128xf32>
    %60 = tpu.matmul %59, %0, %cst_19 {dimension_numbers = #tpu.dot_dimension_numbers<[1], [0], [0], [1], [0, 0, 1, 1], [], []>} : vector<8x64xf32>, vector<64x128xf32>, vector<8x128xf32> -> vector<8x128xf32>
    %c0_20 = arith.constant 0 : index
    %c0_21 = arith.constant 0 : index
    %61 = vector.load %arg2[%c0_20, %c0_21] : memref<8x8xi32, #tpu.memory_space<vmem>>, vector<8x8xi32>
    %cst_22 = arith.constant 0.000000e+00 : f32
    %62 = vector.broadcast %cst_22 : f32 to vector<8x64xf32>
    %63 = vector.extract_strided_slice %61 {offsets = [0, 0], sizes = [8, 1], strides = [1, 1]} : vector<8x8xi32> to vector<8x1xi32>
    %64 = vector.broadcast %63 : vector<8x1xi32> to vector<8x64xi32>
    %65 = arith.cmpi eq, %64, %1 : vector<8x64xi32>
    %cst_23 = arith.constant 1.250000e-01 : f32
    %cst_24 = arith.constant 0.000000e+00 : f32
    %66 = vector.broadcast %cst_23 : f32 to vector<8x64xf32>
    %67 = vector.broadcast %cst_24 : f32 to vector<8x64xf32>
    %68 = arith.select %65, %66, %67 : vector<8x64xi1>, vector<8x64xf32>
    %69 = arith.addf %62, %68 : vector<8x64xf32>
    %70 = vector.extract_strided_slice %61 {offsets = [0, 1], sizes = [8, 1], strides = [1, 1]} : vector<8x8xi32> to vector<8x1xi32>
    %71 = vector.broadcast %70 : vector<8x1xi32> to vector<8x64xi32>
    %72 = arith.cmpi eq, %71, %1 : vector<8x64xi32>
    %cst_25 = arith.constant 1.250000e-01 : f32
    %cst_26 = arith.constant 0.000000e+00 : f32
    %73 = vector.broadcast %cst_25 : f32 to vector<8x64xf32>
    %74 = vector.broadcast %cst_26 : f32 to vector<8x64xf32>
    %75 = arith.select %72, %73, %74 : vector<8x64xi1>, vector<8x64xf32>
    %76 = arith.addf %69, %75 : vector<8x64xf32>
    %77 = vector.extract_strided_slice %61 {offsets = [0, 2], sizes = [8, 1], strides = [1, 1]} : vector<8x8xi32> to vector<8x1xi32>
    %78 = vector.broadcast %77 : vector<8x1xi32> to vector<8x64xi32>
    %79 = arith.cmpi eq, %78, %1 : vector<8x64xi32>
    %cst_27 = arith.constant 1.250000e-01 : f32
    %cst_28 = arith.constant 0.000000e+00 : f32
    %80 = vector.broadcast %cst_27 : f32 to vector<8x64xf32>
    %81 = vector.broadcast %cst_28 : f32 to vector<8x64xf32>
    %82 = arith.select %79, %80, %81 : vector<8x64xi1>, vector<8x64xf32>
    %83 = arith.addf %76, %82 : vector<8x64xf32>
    %84 = vector.extract_strided_slice %61 {offsets = [0, 3], sizes = [8, 1], strides = [1, 1]} : vector<8x8xi32> to vector<8x1xi32>
    %85 = vector.broadcast %84 : vector<8x1xi32> to vector<8x64xi32>
    %86 = arith.cmpi eq, %85, %1 : vector<8x64xi32>
    %cst_29 = arith.constant 1.250000e-01 : f32
    %cst_30 = arith.constant 0.000000e+00 : f32
    %87 = vector.broadcast %cst_29 : f32 to vector<8x64xf32>
    %88 = vector.broadcast %cst_30 : f32 to vector<8x64xf32>
    %89 = arith.select %86, %87, %88 : vector<8x64xi1>, vector<8x64xf32>
    %90 = arith.addf %83, %89 : vector<8x64xf32>
    %91 = vector.extract_strided_slice %61 {offsets = [0, 4], sizes = [8, 1], strides = [1, 1]} : vector<8x8xi32> to vector<8x1xi32>
    %92 = vector.broadcast %91 : vector<8x1xi32> to vector<8x64xi32>
    %93 = arith.cmpi eq, %92, %1 : vector<8x64xi32>
    %cst_31 = arith.constant 1.250000e-01 : f32
    %cst_32 = arith.constant 0.000000e+00 : f32
    %94 = vector.broadcast %cst_31 : f32 to vector<8x64xf32>
    %95 = vector.broadcast %cst_32 : f32 to vector<8x64xf32>
    %96 = arith.select %93, %94, %95 : vector<8x64xi1>, vector<8x64xf32>
    %97 = arith.addf %90, %96 : vector<8x64xf32>
    %98 = vector.extract_strided_slice %61 {offsets = [0, 5], sizes = [8, 1], strides = [1, 1]} : vector<8x8xi32> to vector<8x1xi32>
    %99 = vector.broadcast %98 : vector<8x1xi32> to vector<8x64xi32>
    %100 = arith.cmpi eq, %99, %1 : vector<8x64xi32>
    %cst_33 = arith.constant 1.250000e-01 : f32
    %cst_34 = arith.constant 0.000000e+00 : f32
    %101 = vector.broadcast %cst_33 : f32 to vector<8x64xf32>
    %102 = vector.broadcast %cst_34 : f32 to vector<8x64xf32>
    %103 = arith.select %100, %101, %102 : vector<8x64xi1>, vector<8x64xf32>
    %104 = arith.addf %97, %103 : vector<8x64xf32>
    %105 = vector.extract_strided_slice %61 {offsets = [0, 6], sizes = [8, 1], strides = [1, 1]} : vector<8x8xi32> to vector<8x1xi32>
    %106 = vector.broadcast %105 : vector<8x1xi32> to vector<8x64xi32>
    %107 = arith.cmpi eq, %106, %1 : vector<8x64xi32>
    %cst_35 = arith.constant 1.250000e-01 : f32
    %cst_36 = arith.constant 0.000000e+00 : f32
    %108 = vector.broadcast %cst_35 : f32 to vector<8x64xf32>
    %109 = vector.broadcast %cst_36 : f32 to vector<8x64xf32>
    %110 = arith.select %107, %108, %109 : vector<8x64xi1>, vector<8x64xf32>
    %111 = arith.addf %104, %110 : vector<8x64xf32>
    %112 = vector.extract_strided_slice %61 {offsets = [0, 7], sizes = [8, 1], strides = [1, 1]} : vector<8x8xi32> to vector<8x1xi32>
    %113 = vector.broadcast %112 : vector<8x1xi32> to vector<8x64xi32>
    %114 = arith.cmpi eq, %113, %1 : vector<8x64xi32>
    %cst_37 = arith.constant 1.250000e-01 : f32
    %cst_38 = arith.constant 0.000000e+00 : f32
    %115 = vector.broadcast %cst_37 : f32 to vector<8x64xf32>
    %116 = vector.broadcast %cst_38 : f32 to vector<8x64xf32>
    %117 = arith.select %114, %115, %116 : vector<8x64xi1>, vector<8x64xf32>
    %118 = arith.addf %111, %117 : vector<8x64xf32>
    %cst_39 = arith.constant dense<0.000000e+00> : vector<8x128xf32>
    %119 = tpu.matmul %118, %0, %cst_39 {dimension_numbers = #tpu.dot_dimension_numbers<[1], [0], [0], [1], [0, 0, 1, 1], [], []>} : vector<8x64xf32>, vector<64x128xf32>, vector<8x128xf32> -> vector<8x128xf32>
    %120 = arith.mulf %60, %119 : vector<8x128xf32>
    %cst_40 = arith.constant dense<0.000000e+00> : vector<8xf32>
    %121 = vector.multi_reduction <add>, %120, %cst_40 [1] : vector<8x128xf32> to vector<8xf32>
    %122 = vector.shape_cast %121 : vector<8xf32> to vector<8x1xf32>
    %123 = arith.mulf %60, %60 : vector<8x128xf32>
    %cst_41 = arith.constant dense<0.000000e+00> : vector<8xf32>
    %124 = vector.multi_reduction <add>, %123, %cst_41 [1] : vector<8x128xf32> to vector<8xf32>
    %125 = vector.shape_cast %124 : vector<8xf32> to vector<8x1xf32>
    %126 = arith.mulf %119, %119 : vector<8x128xf32>
    %cst_42 = arith.constant dense<0.000000e+00> : vector<8xf32>
    %127 = vector.multi_reduction <add>, %126, %cst_42 [1] : vector<8x128xf32> to vector<8xf32>
    %128 = vector.shape_cast %127 : vector<8xf32> to vector<8x1xf32>
    %cst_43 = arith.constant 1.000000e-16 : f32
    %129 = vector.broadcast %cst_43 : f32 to vector<8x1xf32>
    %130 = arith.maximumf %125, %129 : vector<8x1xf32>
    %cst_44 = arith.constant 1.000000e-16 : f32
    %131 = vector.broadcast %cst_44 : f32 to vector<8x1xf32>
    %132 = arith.maximumf %128, %131 : vector<8x1xf32>
    %133 = arith.mulf %130, %132 : vector<8x1xf32>
    %134 = math.rsqrt %133 : vector<8x1xf32>
    %135 = arith.mulf %122, %134 : vector<8x1xf32>
    %136 = tpu.iota {dimensions = array<i32: 1>} : vector<1x2xi32>
    %c0_i32 = arith.constant 0 : i32
    %137 = vector.broadcast %c0_i32 : i32 to vector<1x2xi32>
    %138 = arith.cmpi eq, %136, %137 : vector<1x2xi32>
    %c0_45 = arith.constant 0 : index
    %139 = memref.load %arg4[%c0_45] : memref<2xf32, #tpu.memory_space<smem>>
    %c1 = arith.constant 1 : index
    %140 = memref.load %arg4[%c1] : memref<2xf32, #tpu.memory_space<smem>>
    %141 = vector.broadcast %139 : f32 to vector<1x2xf32>
    %142 = vector.broadcast %140 : f32 to vector<1x2xf32>
    %143 = arith.select %138, %141, %142 : vector<1x2xi1>, vector<1x2xf32>
    %c0_i32_46 = arith.constant 0 : i32
    %144 = vector.broadcast %c0_i32_46 : i32 to vector<1x2xi32>
    %145 = arith.cmpi eq, %136, %144 : vector<1x2xi32>
    %c0_47 = arith.constant 0 : index
    %146 = memref.load %arg5[%c0_47] : memref<2xf32, #tpu.memory_space<smem>>
    %c1_48 = arith.constant 1 : index
    %147 = memref.load %arg5[%c1_48] : memref<2xf32, #tpu.memory_space<smem>>
    %148 = vector.broadcast %146 : f32 to vector<1x2xf32>
    %149 = vector.broadcast %147 : f32 to vector<1x2xf32>
    %150 = arith.select %145, %148, %149 : vector<1x2xi1>, vector<1x2xf32>
    %151 = vector.broadcast %135 : vector<8x1xf32> to vector<8x2xf32>
    %152 = vector.broadcast %143 : vector<1x2xf32> to vector<8x2xf32>
    %153 = arith.mulf %151, %152 : vector<8x2xf32>
    %154 = vector.broadcast %150 : vector<1x2xf32> to vector<8x2xf32>
    %155 = arith.addf %153, %154 : vector<8x2xf32>
    %c0_49 = arith.constant 0 : index
    %c0_50 = arith.constant 0 : index
    %156 = vector.load %arg6[%c0_49, %c0_50] : memref<8x2xf32, #tpu.memory_space<vmem>>, vector<8x2xf32>
    tpu.vector_store %arg6[%c0_49, %c0_50], %155 {strides = array<i32>} : memref<8x2xf32, #tpu.memory_space<vmem>>, vector<8x2xf32>,
    return
  }
  func.func @transform_0(%arg0: i32) -> (i32, i32) {
    %c0_i32 = arith.constant 0 : i32
    %c0_i32_0 = arith.constant 0 : i32
    return %arg0, %c0_i32 : i32, i32
  }
  func.func @transform_1(%arg0: i32) -> (i32, i32) {
    %c0_i32 = arith.constant 0 : i32
    %c0_i32_0 = arith.constant 0 : i32
    return %arg0, %c0_i32 : i32, i32
  }
  func.func @transform_2(%arg0: i32) -> (i32, i32) {
    %c0_i32 = arith.constant 0 : i32
    %c0_i32_0 = arith.constant 0 : i32
    %c0_i32_1 = arith.constant 0 : i32
    return %c0_i32, %c0_i32_0 : i32, i32
  }
  func.func @transform_3(%arg0: i32) -> i32 {
    %c0_i32 = arith.constant 0 : i32
    %c0_i32_0 = arith.constant 0 : i32
    return %c0_i32 : i32
  }
  func.func @transform_4(%arg0: i32) -> i32 {
    %c0_i32 = arith.constant 0 : i32
    %c0_i32_0 = arith.constant 0 : i32
    return %c0_i32 : i32
  }
  func.func @transform_5(%arg0: i32) -> (i32, i32) {
    %c0_i32 = arith.constant 0 : i32
    %c0_i32_0 = arith.constant 0 : i32
    return %arg0, %c0_i32 : i32, i32
  }
}

</mosaic_0001>

<llo_original>
// kernel: tpu_custom_call.1
$region0: #{tpu_custom_call.1}
  #allocation0 [shape = 'u32[]', space=smem, size = 0x4, offset = 0x4, fixed_abs, tag = 'smem constant byte address 0x4 - core index']
  #allocation1 [shape = 'u32[144,128]{1,0:T(1,128)}', space=vmem, size = 0x12000, scoped, tag = 'internal scratch']
  %s0 = inlined_call_operand.vmem [shape: s32[16,8], index: 0, kind: input, shape index: {}]
  %s1 = inlined_call_operand.vmem [shape: s32[16,8], index: 1, kind: input, shape index: {}]
  %s2 = inlined_call_operand.hbm [shape: f32[64,128], index: 2, kind: input, shape index: {}]
  %s3 = inlined_call_operand.vmem [shape: f32[2], index: 3, kind: input, shape index: {}]
  %s4 = inlined_call_operand.vmem [shape: f32[2], index: 4, kind: input, shape index: {}]
  %s5 = inlined_call_operand.vmem [shape: f32[16,2], index: 5, kind: output, shape index: {}]
  %s6 = sld [smem:[#allocation0]]
  $region65: #{tpu_custom_call.1} parent=0
    _
  %s8 = ssub.s32 1, %s6
  %s9 = scalar_select 0, %s8, %s6
  $region1: #{tpu_custom_call.1} parent=0
    #allocation2 [shape = 'u8[32768]{0}', space=vmem, size = 0x8000, scoped, tag = 'input window, operand 2, single buffered']
    #allocation3 [shape = 's32[2]{0}', space=sflag, size = 0x8, scoped, tag = 'scoped memory for tpu_custom_call.1']
    #allocation4 [shape = 's32[2]{0}', space=sflag, size = 0x8, scoped, tag = 'scoped memory for tpu_custom_call.1']
    #allocation5 [shape = 'u8[512]{0}', space=smem, size = 0x200, scoped, tag = 'input window, operand 3, single buffered']
    #allocation6 [shape = 'u8[512]{0}', space=smem, size = 0x200, scoped, tag = 'input window, operand 4, single buffered']
    #allocation7 [shape = 's32[1]{0}', space=sflag, size = 0x4, scoped, tag = 'scoped memory for tpu_custom_call.1']
    %10 = vsyncpa [#allocation3], 0
    %11 = vsyncpa [#allocation4], 0
    %12 = vsyncpa [#allocation7], 0
    loop: start=0, step=1, limit=4
    $region2: #{tpu_custom_call.1} parent=1 // loop_pre_header
      _
    $region3: #{tpu_custom_call.1} parent=1 // loop_header
      %s14 = sphi 0, %s18
      %p15 = scmp.ge.s32.totalorder %s14, 4
      %s24 = sphi 0, %s26
      %s27 = sphi 0, %s24
      %s28 = sphi 0, %s27
      %s44 = sphi 0, %s28
      %s50 = sphi 0, %s52
      %s53 = sphi 0, %s50
      %s54 = sphi 0, %s53
      %s70 = sphi 0, %s54
      %s74 = sphi 0, %s74
      %s76 = sphi 0, %s74
      %s77 = sphi 0, %s76
      %s91 = sphi 0, %s77
      %s95 = sphi 0, %s95
      %s97 = sphi 0, %s95
      %s98 = sphi 0, %s97
      %s112 = sphi 0, %s98
      %s116 = sphi 0, %s116
      %s118 = sphi 0, %s116
      %s119 = sphi 0, %s118
      %s133 = sphi 0, %s119
      %s139 = sphi 0, %s141
      %s142 = sphi 0, %s139
      %s143 = sphi 0, %s142
      %s159 = sphi 0, %s143
    $region4: #{tpu_custom_call.1} parent=1 // loop_header_branch
      %17 = sbr.rel (%p15) target = $region8
    $region5: #{tpu_custom_call.1} parent=1 // loop_body
      %s19 = ssub.s32 %s14, 1
      %s20 = ssub.s32 %s14, 2
      %s21 = sadd.s32 %s14, 1
      %s22 = ssub.s32 %s14, %s21
      %p23 = scmp.eq.s32.totalorder %s22, 0
      %s25 = sadd.s32 %s24, 1
      %s26 = scalar_select %p23, %s24, %s25
      %p29 = pneg %p23
      %p30 = scmp.eq.s32.totalorder %s14, 1
      %p31 = por %p29, %p30
      %p32 = scmp.ne.s32.totalorder %s24, %s27
      %p33 = scmp.eq.s32.totalorder %s14, 0
      %p34 = por %p32, %p33
      %p35 = scmp.ne.s32.totalorder %s24, %s27
      %p36 = scmp.eq.s32.totalorder %s19, 1
      %p37 = por %p35, %p36
      %p38 = scmp.ne.s32.totalorder %s27, %s28
      %p39 = scmp.eq.s32.totalorder %s19, 0
      %p40 = por %p38, %p39
      %p41 = scmp.ne.s32.totalorder %s27, %s28
      %p42 = scmp.eq.s32.totalorder %s20, 1
      %p43 = por %p41, %p42
      %p45 = scmp.ne.s32.totalorder %s28, %s44
      %p46 = scmp.eq.s32.totalorder %s20, 0
      %p47 = por %p45, %p46
      %s48 = ssub.s32 %s14, %s21
      %p49 = scmp.eq.s32.totalorder %s48, 0
      %s51 = sadd.s32 %s50, 1
      %s52 = scalar_select %p49, %s50, %s51
      %p55 = pneg %p49
      %p56 = scmp.eq.s32.totalorder %s14, 1
      %p57 = por %p55, %p56
      %p58 = scmp.ne.s32.totalorder %s50, %s53
      %p59 = scmp.eq.s32.totalorder %s14, 0
      %p60 = por %p58, %p59
      %p61 = scmp.ne.s32.totalorder %s50, %s53
      %p62 = scmp.eq.s32.totalorder %s19, 1
      %p63 = por %p61, %p62
      %p64 = scmp.ne.s32.totalorder %s53, %s54
      %p65 = scmp.eq.s32.totalorder %s19, 0
      %p66 = por %p64, %p65
      %p67 = scmp.ne.s32.totalorder %s53, %s54
      %p68 = scmp.eq.s32.totalorder %s20, 1
      %p69 = por %p67, %p68
      %p71 = scmp.ne.s32.totalorder %s54, %s70
      %p72 = scmp.eq.s32.totalorder %s20, 0
      %p73 = por %p71, %p72
      %s75 = sadd.s32 %s74, 1
      %p78 = scmp.eq.s32.totalorder %s14, 1
      %p79 = scmp.ne.s32.totalorder %s74, %s76
      %p80 = scmp.eq.s32.totalorder %s14, 0
      %p81 = por %p79, %p80
      %p82 = scmp.ne.s32.totalorder %s74, %s76
      %p83 = scmp.eq.s32.totalorder %s19, 1
      %p84 = por %p82, %p83
      %p85 = scmp.ne.s32.totalorder %s76, %s77
      %p86 = scmp.eq.s32.totalorder %s19, 0
      %p87 = por %p85, %p86
      %p88 = scmp.ne.s32.totalorder %s76, %s77
      %p89 = scmp.eq.s32.totalorder %s20, 1
      %p90 = por %p88, %p89
      %p92 = scmp.ne.s32.totalorder %s77, %s91
      %p93 = scmp.eq.s32.totalorder %s20, 0
      %p94 = por %p92, %p93
      %s96 = sadd.s32 %s95, 1
      %p99 = scmp.eq.s32.totalorder %s14, 1
      %p100 = scmp.ne.s32.totalorder %s95, %s97
      %p101 = scmp.eq.s32.totalorder %s14, 0
      %p102 = por %p100, %p101
      %p103 = scmp.ne.s32.totalorder %s95, %s97
      %p104 = scmp.eq.s32.totalorder %s19, 1
      %p105 = por %p103, %p104
      %p106 = scmp.ne.s32.totalorder %s97, %s98
      %p107 = scmp.eq.s32.totalorder %s19, 0
      %p108 = por %p106, %p107
      %p109 = scmp.ne.s32.totalorder %s97, %s98
      %p110 = scmp.eq.s32.totalorder %s20, 1
      %p111 = por %p109, %p110
      %p113 = scmp.ne.s32.totalorder %s98, %s112
      %p114 = scmp.eq.s32.totalorder %s20, 0
      %p115 = por %p113, %p114
      %s117 = sadd.s32 %s116, 1
      %p120 = scmp.eq.s32.totalorder %s14, 1
      %p121 = scmp.ne.s32.totalorder %s116, %s118
      %p122 = scmp.eq.s32.totalorder %s14, 0
      %p123 = por %p121, %p122
      %p124 = scmp.ne.s32.totalorder %s116, %s118
      %p125 = scmp.eq.s32.totalorder %s19, 1
      %p126 = por %p124, %p125
      %p127 = scmp.ne.s32.totalorder %s118, %s119
      %p128 = scmp.eq.s32.totalorder %s19, 0
      %p129 = por %p127, %p128
      %p130 = scmp.ne.s32.totalorder %s118, %s119
      %p131 = scmp.eq.s32.totalorder %s20, 1
      %p132 = por %p130, %p131
      %p134 = scmp.ne.s32.totalorder %s119, %s133
      %p135 = scmp.eq.s32.totalorder %s20, 0
      %p136 = por %p134, %p135
      %s137 = ssub.s32 %s14, %s21
      %p138 = scmp.eq.s32.totalorder %s137, 0
      %s140 = sadd.s32 %s139, 1
      %s141 = scalar_select %p138, %s139, %s140
      %p144 = pneg %p138
      %p145 = scmp.eq.s32.totalorder %s14, 1
      %p146 = por %p144, %p145
      %p147 = scmp.ne.s32.totalorder %s139, %s142
      %p148 = scmp.eq.s32.totalorder %s14, 0
      %p149 = por %p147, %p148
      %p150 = scmp.ne.s32.totalorder %s139, %s142
      %p151 = scmp.eq.s32.totalorder %s19, 1
      %p152 = por %p150, %p151
      %p153 = scmp.ne.s32.totalorder %s142, %s143
      %p154 = scmp.eq.s32.totalorder %s19, 0
      %p155 = por %p153, %p154
      %p156 = scmp.ne.s32.totalorder %s142, %s143
      %p157 = scmp.eq.s32.totalorder %s20, 1
      %p158 = por %p156, %p157
      %p160 = scmp.ne.s32.totalorder %s143, %s159
      %p161 = scmp.eq.s32.totalorder %s20, 0
      %p162 = por %p160, %p161
      %p163 = scmp.le.s32.totalorder 1, %s14
      %p164 = scmp.lt.s32.totalorder %s14, 3
      %p165 = pnand %p163, %p164
      %p166 = pneg %p165
      // Predicated region
      $region9: #{tpu_custom_call.1} parent=5 // pred_check
        _
      $region10: #{tpu_custom_call.1} parent=5 // pred_check_branch
        %168 = sbr.rel (%p165) target = $region12
      $region11: #{tpu_custom_call.1} parent=5 // pred_region
        %s169 = ssub.s32 %s14, 1
        // Predicated region
        $region13: #{tpu_custom_call.1} parent=11 // pred_check
          %p170 = pneg %p87
        $region14: #{tpu_custom_call.1} parent=11 // pred_check_branch
          %172 = sbr.rel (%p170) target = $region16
        $region15: #{tpu_custom_call.1} parent=11 // pred_region
          %s174 = ssub.s32 1024, 1024
          %175 = vsyncadd [#allocation3], %s174
          %s176 = sshll.u32 [#allocation2], 4
          %s177 = int_to_ptr.vmem [resolvable:$true] %s176
          %182 = dma.hbm_to_vmem [thread:$0]  %s2, 1024, %s177, [#allocation3], 128, 128, 8
        $region16: #{tpu_custom_call.1} parent=11 // pred_fallthru
          _
        // Predicated region
        $region17: #{tpu_custom_call.1} parent=11 // pred_check
          %p183 = pneg %p108
        $region18: #{tpu_custom_call.1} parent=11 // pred_check_branch
          %185 = sbr.rel (%p183) target = $region20
        $region19: #{tpu_custom_call.1} parent=11 // pred_region
          %s187 = ssub.s32 16, 16
          %188 = vsyncadd [#allocation4], %s187
          %s190 = sshll.u32 %s3, 4
          %s191 = int_to_ptr.vmem [resolvable:$true] %s190
          %193 = dma.vmem_to_smem %s191, 16, [#allocation5], [#allocation4]
        $region20: #{tpu_custom_call.1} parent=11 // pred_fallthru
          _
        // Predicated region
        $region21: #{tpu_custom_call.1} parent=11 // pred_check
          %p194 = pneg %p129
        $region22: #{tpu_custom_call.1} parent=11 // pred_check_branch
          %196 = sbr.rel (%p194) target = $region24
        $region23: #{tpu_custom_call.1} parent=11 // pred_region
          %s198 = ssub.s32 16, 16
          %199 = vsyncadd [#allocation7], %s198
          %s201 = sshll.u32 %s4, 4
          %s202 = int_to_ptr.vmem [resolvable:$true] %s201
          %204 = dma.vmem_to_smem %s202, 16, [#allocation6], [#allocation7]
        $region24: #{tpu_custom_call.1} parent=11 // pred_fallthru
          _
      $region12: #{tpu_custom_call.1} parent=5 // pred_fallthru
        _
      %p205 = scmp.lt.s32.totalorder %s14, 2
      // Predicated region
      $region25: #{tpu_custom_call.1} parent=5 // pred_check
        %p206 = pneg %p205
      $region26: #{tpu_custom_call.1} parent=5 // pred_check_branch
        %208 = sbr.rel (%p206) target = $region28
      $region27: #{tpu_custom_call.1} parent=5 // pred_region
        // Predicated region
        $region29: #{tpu_custom_call.1} parent=27 // pred_check
          %p209 = pneg %p34
        $region30: #{tpu_custom_call.1} parent=27 // pred_check_branch
          %211 = sbr.rel (%p209) target = $region32
        $region31: #{tpu_custom_call.1} parent=27 // pred_region
          %p212 = scmp.lt.s32.totalorder %s14, 1
          %s213 = scalar_select %p212, %s14, 1
          %s214 = smul.addr %s213, 8
          %s215 = scalar_lea.vmem %s0, %s214
        $region32: #{tpu_custom_call.1} parent=27 // pred_fallthru
          _
        // Predicated region
        $region33: #{tpu_custom_call.1} parent=27 // pred_check
          %p216 = pneg %p60
        $region34: #{tpu_custom_call.1} parent=27 // pred_check_branch
          %218 = sbr.rel (%p216) target = $region36
        $region35: #{tpu_custom_call.1} parent=27 // pred_region
          %p219 = scmp.lt.s32.totalorder %s14, 1
          %s220 = scalar_select %p219, %s14, 1
          %s221 = smul.addr %s220, 8
          %s222 = scalar_lea.vmem %s1, %s221
        $region36: #{tpu_custom_call.1} parent=27 // pred_fallthru
          _
      $region28: #{tpu_custom_call.1} parent=5 // pred_fallthru
        _
      %p223 = scmp.le.s32.totalorder 1, %s14
      %p224 = scmp.lt.s32.totalorder %s14, 3
      %p225 = pnand %p223, %p224
      %p226 = pneg %p225
      // Predicated region
      $region37: #{tpu_custom_call.1} parent=5 // pred_check
        _
      $region38: #{tpu_custom_call.1} parent=5 // pred_check_branch
        %228 = sbr.rel (%p225) target = $region40
      $region39: #{tpu_custom_call.1} parent=5 // pred_region
        %s229 = ssub.s32 %s14, 1
        // Predicated region
        $region41: #{tpu_custom_call.1} parent=39 // pred_check
          %p230 = pneg %p87
        $region42: #{tpu_custom_call.1} parent=39 // pred_check_branch
          %232 = sbr.rel (%p230) target = $region44
        $region43: #{tpu_custom_call.1} parent=39 // pred_region
          %233 = dma.done [#allocation3], 1024
        $region44: #{tpu_custom_call.1} parent=39 // pred_fallthru
          _
        // Predicated region
        $region45: #{tpu_custom_call.1} parent=39 // pred_check
          %p234 = pneg %p108
        $region46: #{tpu_custom_call.1} parent=39 // pred_check_branch
          %236 = sbr.rel (%p234) target = $region48
        $region47: #{tpu_custom_call.1} parent=39 // pred_region
          %237 = dma.done [#allocation4], 16
        $region48: #{tpu_custom_call.1} parent=39 // pred_fallthru
          _
        // Predicated region
        $region49: #{tpu_custom_call.1} parent=39 // pred_check
          %p238 = pneg %p129
        $region50: #{tpu_custom_call.1} parent=39 // pred_check_branch
          %240 = sbr.rel (%p238) target = $region52
        $region51: #{tpu_custom_call.1} parent=39 // pred_region
          %241 = dma.done [#allocation7], 16
        $region52: #{tpu_custom_call.1} parent=39 // pred_fallthru
          _
        %242 = sfence
        %p243 = scmp.lt.s32.totalorder %s19, 1
        %s244 = scalar_select %p243, %s19, 1
        %s245 = smul.addr %s244, 8
        %s246 = scalar_lea.vmem %s0, %s245
        %p247 = pneg %p40
        %p248 = pneg %p37
        %p249 = scmp.lt.s32.totalorder %s19, 1
        %s250 = scalar_select %p249, %s19, 1
        %s251 = smul.addr %s250, 8
        %s252 = scalar_lea.vmem %s1, %s251
        %p253 = pneg %p66
        %p254 = pneg %p63
        %p255 = pneg %p87
        %p256 = pneg %p84
        %p257 = pneg %p108
        %p258 = pneg %p105
        %p259 = pneg %p129
        %p260 = pneg %p126
        %p261 = pneg %p155
        %p262 = pneg %p152
        %p263 = scmp.lt.s32.totalorder %s19, 1
        %s264 = scalar_select %p263, %s19, 1
        %s265 = smul.addr %s264, 8
        %s266 = scalar_lea.vmem %s5, %s265
        %p267 = scmp.lt.s32.totalorder %s19, 1
        %s268 = scalar_select %p267, %s19, 1
        %s269 = smul.addr %s268, 8
        %s270 = scalar_lea.vmem %s0, %s269
        %p271 = scmp.lt.s32.totalorder %s19, 1
        %s272 = scalar_select %p271, %s19, 1
        %s273 = smul.addr %s272, 8
        %s274 = scalar_lea.vmem %s1, %s273
        %p275 = scmp.lt.s32.totalorder %s19, 1
        %s276 = scalar_select %p275, %s19, 1
        %s277 = smul.addr %s276, 8
        %s278 = scalar_lea.vmem %s5, %s277
        %v279 = vld [vmem:[#allocation2] sm:$0xff]
        %v280 = vld [vmem:[#allocation2 + $0x8] sm:$0xff]
        %v281 = vld [vmem:[#allocation2 + $0x10] sm:$0xff]
        %v282 = vld [vmem:[#allocation2 + $0x18] sm:$0xff]
        %v283 = vld [vmem:[#allocation2 + $0x20] sm:$0xff]
        %v284 = vld [vmem:[#allocation2 + $0x28] sm:$0xff]
        %v285 = vld [vmem:[#allocation2 + $0x30] sm:$0xff]
        %v286 = vld [vmem:[#allocation2 + $0x38] sm:$0xff]
        %v287 = vlaneseq
        %v288 = vand.u32 %v287, 127
        %v289 = vld [vmem:[%s270] sm:$0xff]
        %290 = vset.pattern.permute.xlu0 0
        %291 = vperm.xlu0 %290, %v289
        %v292 = vpop.permute.xlu0 %291
        %vm293 = vcmp.eq.s32.totalorder %v292, %v288
        %v294 = vsel %vm293, 0.125, 0.0
        %v295 = vadd.f32 %v294, 0.0
        %296 = vset.pattern.permute.xlu0 1
        %297 = vperm.xlu0 %296, %v289
        %v298 = vpop.permute.xlu0 %297
        %vm299 = vcmp.eq.s32.totalorder %v298, %v288
        %v300 = vsel %vm299, 0.125, 0.0
        %v301 = vadd.f32 %v295, %v300
        %302 = vset.pattern.permute.xlu0 2
        %303 = vperm.xlu0 %302, %v289
        %v304 = vpop.permute.xlu0 %303
        %vm305 = vcmp.eq.s32.totalorder %v304, %v288
        %v306 = vsel %vm305, 0.125, 0.0
        %v307 = vadd.f32 %v301, %v306
        %308 = vset.pattern.permute.xlu0 3
        %309 = vperm.xlu0 %308, %v289
        %v310 = vpop.permute.xlu0 %309
        %vm311 = vcmp.eq.s32.totalorder %v310, %v288
        %v312 = vsel %vm311, 0.125, 0.0
        %v313 = vadd.f32 %v307, %v312
        %314 = vset.pattern.permute.xlu0 4
        %315 = vperm.xlu0 %314, %v289
        %v316 = vpop.permute.xlu0 %315
        %vm317 = vcmp.eq.s32.totalorder %v316, %v288
        %v318 = vsel %vm317, 0.125, 0.0
        %v319 = vadd.f32 %v313, %v318
        %320 = vset.pattern.permute.xlu0 5
        %321 = vperm.xlu0 %320, %v289
        %v322 = vpop.permute.xlu0 %321
        %vm323 = vcmp.eq.s32.totalorder %v322, %v288
        %v324 = vsel %vm323, 0.125, 0.0
        %v325 = vadd.f32 %v319, %v324
        %326 = vset.pattern.permute.xlu0 6
        %327 = vperm.xlu0 %326, %v289
        %v328 = vpop.permute.xlu0 %327
        %vm329 = vcmp.eq.s32.totalorder %v328, %v288
        %v330 = vsel %vm329, 0.125, 0.0
        %v331 = vadd.f32 %v325, %v330
        %332 = vset.pattern.permute.xlu0 7
        %333 = vperm.xlu0 %332, %v289
        %v334 = vpop.permute.xlu0 %333
        %vm335 = vcmp.eq.s32.totalorder %v334, %v288
        %v336 = vsel %vm335, 0.125, 0.0
        %v337 = vadd.f32 %v331, %v336
        %vm338 = vcmask 523264
        %v340 = vsel %vm338, %v337, 0
        %342 = vmatprep.subr.mxu0 0.0
        %343 = vmatpush1.msra.mxu0 %v279
        %344 = vmatprep.subr.mxu0 0.0
        %345 = vmatpush1.msra.mxu0 %v280
        %346 = vmatprep.subr.mxu0 0.0
        %347 = vmatpush1.msra.mxu0 %v281
        %348 = vmatprep.subr.mxu0 0.0
        %349 = vmatpush1.msra.mxu0 %v282
        %350 = vmatprep.subr.mxu0 0.0
        %351 = vmatpush1.msra.mxu0 %v283
        %352 = vmatprep.subr.mxu0 0.0
        %353 = vmatpush1.msra.mxu0 %v284
        %354 = vmatprep.subr.mxu0 0.0
        %355 = vmatpush1.msra.mxu0 %v285
        %356 = vmatprep.subr.mxu0 0.0
        %357 = vmatpush1.msra.mxu0 %v286
        %358 = vmatprep.subr.mxu0 0.0
        %359 = vmatpush1.msra.mxu0 0.0
        %360 = vmatprep.subr.mxu0 0.0
        %361 = vmatpush1.msra.mxu0 0.0
        %362 = vmatprep.subr.mxu0 0.0
        %363 = vmatpush1.msra.mxu0 0.0
        %364 = vmatprep.subr.mxu0 0.0
        %365 = vmatpush1.msra.mxu0 0.0
        %366 = vmatprep.subr.mxu0 0.0
        %367 = vmatpush1.msra.mxu0 0.0
        %368 = vmatprep.subr.mxu0 0.0
        %369 = vmatpush1.msra.mxu0 0.0
        %370 = vmatprep.subr.mxu0 0.0
        %371 = vmatpush1.msra.mxu0 0.0
        %372 = vmatprep.subr.mxu0 0.0
        %373 = vmatpush1.msra.mxu0 0.0
        %374 = vmatprep.subr.mxu0 0.0
        %375 = vmatpush1.msra.mxu0 0.0
        %376 = vmatprep.subr.mxu0 0.0
        %377 = vmatpush1.msra.mxu0 0.0
        %378 = vmatprep.subr.mxu0 0.0
        %379 = vmatpush1.msra.mxu0 0.0
        %380 = vmatprep.subr.mxu0 0.0
        %381 = vmatpush1.msra.mxu0 0.0
        %382 = vmatprep.subr.mxu0 0.0
        %383 = vmatpush1.msra.mxu0 0.0
        %384 = vmatprep.subr.mxu0 0.0
        %385 = vmatpush1.msra.mxu0 0.0
        %386 = vmatprep.subr.mxu0 0.0
        %387 = vmatpush1.msra.mxu0 0.0
        %388 = vmatprep.subr.mxu0 0.0
        %389 = vmatpush1.msra.mxu0 0.0
        %390 = vmatprep.subr.mxu0 0.0
        %391 = vmatpush1.msra.mxu0 0.0
        %392 = vmatprep.subr.mxu0 0.0
        %393 = vmatpush1.msra.mxu0 0.0
        %394 = vmatprep.subr.mxu0 0.0
        %395 = vmatpush1.msra.mxu0 0.0
        %396 = vmatprep.subr.mxu0 0.0
        %397 = vmatpush1.msra.mxu0 0.0
        %398 = vmatprep.subr.mxu0 0.0
        %399 = vmatpush1.msra.mxu0 0.0
        %400 = vmatprep.subr.mxu0 0.0
        %401 = vmatpush1.msra.mxu0 0.0
        %402 = vmatprep.subr.mxu0 0.0
        %403 = vmatpush1.msra.mxu0 0.0
        %404 = vmatprep.subr.mxu0 0.0
        %405 = vmatpush1.msra.mxu0 0.0
        %406 = vmatprep.mubr.f32.mxu0 0.0
        %407 = vmatmul.mubr.f32.gmra.mrb[0].mxu0 %v340
        %v408 = vpop.f32.mrb[0].mxu0
        %v409 = vadd.f32 0.0, %v408
        %v410 = vpop.f32.mrb[0].mxu0
        %411 = vdwg.mxu0
        %v412 = vld [vmem:[%s274] sm:$0xff]
        %413 = vset.pattern.permute.xlu0 0
        %414 = vperm.xlu0 %413, %v412
        %v415 = vpop.permute.xlu0 %414
        %vm416 = vcmp.eq.s32.totalorder %v415, %v288
        %v417 = vsel %vm416, 0.125, 0.0
        %v418 = vadd.f32 %v417, 0.0
        %419 = vset.pattern.permute.xlu0 1
        %420 = vperm.xlu0 %419, %v412
        %v421 = vpop.permute.xlu0 %420
        %vm422 = vcmp.eq.s32.totalorder %v421, %v288
        %v423 = vsel %vm422, 0.125, 0.0
        %v424 = vadd.f32 %v418, %v423
        %425 = vset.pattern.permute.xlu0 2
        %426 = vperm.xlu0 %425, %v412
        %v427 = vpop.permute.xlu0 %426
        %vm428 = vcmp.eq.s32.totalorder %v427, %v288
        %v429 = vsel %vm428, 0.125, 0.0
        %v430 = vadd.f32 %v424, %v429
        %431 = vset.pattern.permute.xlu0 3
        %432 = vperm.xlu0 %431, %v412
        %v433 = vpop.permute.xlu0 %432
        %vm434 = vcmp.eq.s32.totalorder %v433, %v288
        %v435 = vsel %vm434, 0.125, 0.0
        %v436 = vadd.f32 %v430, %v435
        %437 = vset.pattern.permute.xlu0 4
        %438 = vperm.xlu0 %437, %v412
        %v439 = vpop.permute.xlu0 %438
        %vm440 = vcmp.eq.s32.totalorder %v439, %v288
        %v441 = vsel %vm440, 0.125, 0.0
        %v442 = vadd.f32 %v436, %v441
        %443 = vset.pattern.permute.xlu0 5
        %444 = vperm.xlu0 %443, %v412
        %v445 = vpop.permute.xlu0 %444
        %vm446 = vcmp.eq.s32.totalorder %v445, %v288
        %v447 = vsel %vm446, 0.125, 0.0
        %v448 = vadd.f32 %v442, %v447
        %449 = vset.pattern.permute.xlu0 6
        %450 = vperm.xlu0 %449, %v412
        %v451 = vpop.permute.xlu0 %450
        %vm452 = vcmp.eq.s32.totalorder %v451, %v288
        %v453 = vsel %vm452, 0.125, 0.0
        %v454 = vadd.f32 %v448, %v453
        %455 = vset.pattern.permute.xlu0 7
        %456 = vperm.xlu0 %455, %v412
        %v457 = vpop.permute.xlu0 %456
        %vm458 = vcmp.eq.s32.totalorder %v457, %v288
        %v459 = vsel %vm458, 0.125, 0.0
        %v460 = vadd.f32 %v454, %v459
        %v462 = vsel %vm338, %v460, 0
        %464 = vmatprep.subr.mxu0 0.0
        %465 = vmatpush1.msra.mxu0 %v279
        %466 = vmatprep.subr.mxu0 0.0
        %467 = vmatpush1.msra.mxu0 %v280
        %468 = vmatprep.subr.mxu0 0.0
        %469 = vmatpush1.msra.mxu0 %v281
        %470 = vmatprep.subr.mxu0 0.0
        %471 = vmatpush1.msra.mxu0 %v282
        %472 = vmatprep.subr.mxu0 0.0
        %473 = vmatpush1.msra.mxu0 %v283
        %474 = vmatprep.subr.mxu0 0.0
        %475 = vmatpush1.msra.mxu0 %v284
        %476 = vmatprep.subr.mxu0 0.0
        %477 = vmatpush1.msra.mxu0 %v285
        %478 = vmatprep.subr.mxu0 0.0
        %479 = vmatpush1.msra.mxu0 %v286
        %480 = vmatprep.subr.mxu0 0.0
        %481 = vmatpush1.msra.mxu0 0.0
        %482 = vmatprep.subr.mxu0 0.0
        %483 = vmatpush1.msra.mxu0 0.0
        %484 = vmatprep.subr.mxu0 0.0
        %485 = vmatpush1.msra.mxu0 0.0
        %486 = vmatprep.subr.mxu0 0.0
        %487 = vmatpush1.msra.mxu0 0.0
        %488 = vmatprep.subr.mxu0 0.0
        %489 = vmatpush1.msra.mxu0 0.0
        %490 = vmatprep.subr.mxu0 0.0
        %491 = vmatpush1.msra.mxu0 0.0
        %492 = vmatprep.subr.mxu0 0.0
        %493 = vmatpush1.msra.mxu0 0.0
        %494 = vmatprep.subr.mxu0 0.0
        %495 = vmatpush1.msra.mxu0 0.0
        %496 = vmatprep.subr.mxu0 0.0
        %497 = vmatpush1.msra.mxu0 0.0
        %498 = vmatprep.subr.mxu0 0.0
        %499 = vmatpush1.msra.mxu0 0.0
        %500 = vmatprep.subr.mxu0 0.0
        %501 = vmatpush1.msra.mxu0 0.0
        %502 = vmatprep.subr.mxu0 0.0
        %503 = vmatpush1.msra.mxu0 0.0
        %504 = vmatprep.subr.mxu0 0.0
        %505 = vmatpush1.msra.mxu0 0.0
        %506 = vmatprep.subr.mxu0 0.0
        %507 = vmatpush1.msra.mxu0 0.0
        %508 = vmatprep.subr.mxu0 0.0
        %509 = vmatpush1.msra.mxu0 0.0
        %510 = vmatprep.subr.mxu0 0.0
        %511 = vmatpush1.msra.mxu0 0.0
        %512 = vmatprep.subr.mxu0 0.0
        %513 = vmatpush1.msra.mxu0 0.0
        %514 = vmatprep.subr.mxu0 0.0
        %515 = vmatpush1.msra.mxu0 0.0
        %516 = vmatprep.subr.mxu0 0.0
        %517 = vmatpush1.msra.mxu0 0.0
        %518 = vmatprep.subr.mxu0 0.0
        %519 = vmatpush1.msra.mxu0 0.0
        %520 = vmatprep.subr.mxu0 0.0
        %521 = vmatpush1.msra.mxu0 0.0
        %522 = vmatprep.subr.mxu0 0.0
        %523 = vmatpush1.msra.mxu0 0.0
        %524 = vmatprep.subr.mxu0 0.0
        %525 = vmatpush1.msra.mxu0 0.0
        %526 = vmatprep.subr.mxu0 0.0
        %527 = vmatpush1.msra.mxu0 0.0
        %528 = vmatprep.mubr.f32.mxu0 0.0
        %529 = vmatmul.mubr.f32.gmra.mrb[0].mxu0 %v462
        %v530 = vpop.f32.mrb[0].mxu0
        %v531 = vadd.f32 0.0, %v530
        %v532 = vpop.f32.mrb[0].mxu0
        %533 = vdwg.mxu0
        %v534 = vmul.f32 %v409, %v531
        %535 = vadd.xlane.f32.xlu0 %v534
        %v536 = vpop.xlane.xlu0 %535
        %v537 = vmul.f32 %v409, %v409
        %538 = vadd.xlane.f32.xlu0 %v537
        %v539 = vpop.xlane.xlu0 %538
        %v540 = vmul.f32 %v531, %v531
        %541 = vadd.xlane.f32.xlu0 %v540
        %v542 = vpop.xlane.xlu0 %541
        %v543 = vmax.f32 %v539, 1e-16
        %v544 = vmax.f32 %v542, 1e-16
        %v545 = vmul.f32 %v543, %v544
        %v546 = vrsqrt.pop %v545
        %v547 = vmul.f32 %v536, %v546
        %vm548 = vcmp.eq.s32.totalorder %v288, 0
        %s549 = sld [smem:[#allocation5]]
        %s550 = sld [smem:[#allocation5 + $0x1]]
        %v551 = vstv %s549
        %v552 = vstv %s550
        %v553 = vsel %vm548, %v551, %v552
        %s554 = sld [smem:[#allocation6]]
        %s555 = sld [smem:[#allocation6 + $0x1]]
        %v556 = vstv %s554
        %v557 = vstv %s555
        %v558 = vsel %vm548, %v556, %v557
        %v559 = vmul.f32 %v547, %v553
        %v560 = vadd.f32 %v559, %v558
        %vm561 = vcmask 15360
        %562 = vst.msk [vmem:[%s278] sm:$0xff] %vm561, %v560
        %p563 = scmp.lt.s32.totalorder %s19, 1
        %s564 = scalar_select %p563, %s19, 1
        %s565 = smul.addr %s564, 8
        %s566 = scalar_lea.vmem %s5, %s565
        // Predicated region
        $region53: #{tpu_custom_call.1} parent=39 // pred_check
          %p567 = pneg %p152
        $region54: #{tpu_custom_call.1} parent=39 // pred_check_branch
          %569 = sbr.rel (%p567) target = $region56
        $region55: #{tpu_custom_call.1} parent=39 // pred_region
          _
        $region56: #{tpu_custom_call.1} parent=39 // pred_fallthru
          _
      $region40: #{tpu_custom_call.1} parent=5 // pred_fallthru
        _
      %p570 = scmp.le.s32.totalorder 2, %s14
      // Predicated region
      $region57: #{tpu_custom_call.1} parent=5 // pred_check
        %p571 = pneg %p570
      $region58: #{tpu_custom_call.1} parent=5 // pred_check_branch
        %573 = sbr.rel (%p571) target = $region60
      $region59: #{tpu_custom_call.1} parent=5 // pred_region
        %s574 = ssub.s32 %s14, 2
        // Predicated region
        $region61: #{tpu_custom_call.1} parent=59 // pred_check
          %p575 = pneg %p158
        $region62: #{tpu_custom_call.1} parent=59 // pred_check_branch
          %577 = sbr.rel (%p575) target = $region64
        $region63: #{tpu_custom_call.1} parent=59 // pred_region
          %p578 = scmp.lt.s32.totalorder %s20, 1
          %s579 = scalar_select %p578, %s20, 1
          %s580 = smul.addr %s579, 8
          %s581 = scalar_lea.vmem %s5, %s580
        $region64: #{tpu_custom_call.1} parent=59 // pred_fallthru
          _
      $region60: #{tpu_custom_call.1} parent=5 // pred_fallthru
        _
    $region6: #{tpu_custom_call.1} parent=1 // loop_footer
      %s18 = sadd.s32 1, %s14
    $region7: #{tpu_custom_call.1} parent=1 // loop_footer_branch
      %13 = sbr.rel target = $region3
    $region8: #{tpu_custom_call.1} parent=1 // loop_exit
      _
    %582 = vsyncpa [#allocation3], 1
    %s583 = scalar_lea.sflag [#allocation3], 1
    %584 = vsyncpa %s583, 1
    %585 = vsyncpa [#allocation4], 1
    %s586 = scalar_lea.sflag [#allocation4], 1
    %587 = vsyncpa %s586, 1
    %588 = vsyncpa [#allocation7], 1

</llo_original>
